<compile_context>
chip_gen: v7x
topology: tpu7x:2x2x1
jax: 0.10.0
libtpu: 0.0.40
codegen_flags: <defaults>
</compile_context>

<pallas_src>
import functools
import math

import jax
import jax.numpy as jnp
from jax.experimental import pallas as pl
from jax.experimental.pallas import tpu as pltpu


# ---------------------------------- Pallas kernel ----------------------------------

def attention_kernel(x_ref, wqkv_ref, bqkv_ref, wpj_ref, bpj_ref,
                     xo_ref, attn_ref, *, num_heads, head_dim, scale):
    f32 = jnp.float32
    bf16 = jnp.bfloat16

    x = x_ref[0].astype(f32)                                   # (N, C)
    N, C = x.shape

    # ---- fused head-major QKV: one batched MXU pass, no in-kernel lane slicing ----
    xb = jnp.broadcast_to(x.astype(bf16), (num_heads, N, C))   # (nh, N, C)
    qkv = jnp.einsum('hnc,hck->hnk', xb, wqkv_ref[...],
                     preferred_element_type=f32) + bqkv_ref[...]   # (nh, N, 3*hd)
    q = qkv[:, :, :head_dim] * scale
    k = qkv[:, :, head_dim:2 * head_dim]
    v = qkv[:, :, 2 * head_dim:]

    # ---- scores + softmax, batched over heads ----
    s = jnp.einsum('hqd,hkd->hqk', q.astype(bf16), k.astype(bf16),
                   preferred_element_type=f32)                 # (nh, N, N)
    s = s - jnp.max(s, axis=-1, keepdims=True)
    e = jnp.exp(s)
    probs = e * pl.reciprocal(jnp.sum(e, axis=-1, keepdims=True), approx=True)
    attn_ref[0] = probs.astype(attn_ref.dtype)                 # state['attn'] writeback

    # ---- attn @ V, then head-major projection (sum over heads == proj of concat) ----
    pv = jnp.einsum('hqk,hkd->hqd', probs.astype(bf16), v.astype(bf16),
                    preferred_element_type=f32)                # (nh, N, hd)
    t = jnp.einsum('hnd,hdc->hnc', pv.astype(bf16), wpj_ref[...],
                   preferred_element_type=f32)                 # (nh, N, C)
    o = jnp.sum(t, axis=0) + bpj_ref[0]                        # (N, C)
    xo_ref[0] = o.astype(xo_ref.dtype)


# ---------------------------------- wrapper ----------------------------------------

def attention_forward(x, p, num_heads):
    B, N, C = x.shape
    hd = C // num_heads
    scale = hd ** -0.5
    bf16 = jnp.bfloat16
    f32 = jnp.float32

    # --- head-major weight repacking (plain JAX, outside the kernel: free) ---
    def head_major_out(w):                  # (C, C) -> (nh, C, hd): split output cols
        return jnp.transpose(w.reshape(C, num_heads, hd), (1, 0, 2))

    wqkv = jnp.concatenate(
        [head_major_out(p["q_w"]), head_major_out(p["k_w"]), head_major_out(p["v_w"])],
        axis=-1).astype(bf16)                                        # (nh, C, 3*hd)
    bqkv = jnp.concatenate(
        [p["q_b"].reshape(num_heads, 1, hd),
         p["k_b"].reshape(num_heads, 1, hd),
         p["v_b"].reshape(num_heads, 1, hd)], axis=-1).astype(f32)   # (nh, 1, 3*hd)
    wproj = p["proj_w"].reshape(num_heads, hd, C).astype(bf16)       # (nh, hd, C)
    bproj = p["proj_b"].astype(f32)                                  # (1, C)

    kern = functools.partial(attention_kernel, num_heads=num_heads,
                             head_dim=hd, scale=scale)

    def const_spec(shape):                  # whole-array, grid-invariant block
        nd = len(shape)
        return pl.BlockSpec(shape, lambda b, _z=(0,) * nd: _z)

    in_specs = [
        pl.BlockSpec((1, N, C), lambda b: (b, 0, 0)),                # x
        const_spec((num_heads, C, 3 * hd)),                          # fused qkv w (bf16)
        const_spec((num_heads, 1, 3 * hd)),                          # fused qkv bias
        const_spec((num_heads, hd, C)),                              # proj w (bf16)
        const_spec((1, C)),                                          # proj b
    ]
    out_specs = [
        pl.BlockSpec((1, N, C), lambda b: (b, 0, 0)),
        pl.BlockSpec((1, num_heads, N, N), lambda b: (b, 0, 0, 0)),
    ]
    out_shape = [
        jax.ShapeDtypeStruct((B, N, C), x.dtype),
        jax.ShapeDtypeStruct((B, num_heads, N, N), jnp.float32),     # attn maps (f32)
    ]

    flops = int(2 * B * N * (4 * C * C) + 4 * B * N * N * C)
    transcendentals = int(B * num_heads * N * N)
    bytes_accessed = int(2 * B * N * C * 4                           # x in + out (f32)
                         + B * num_heads * N * N * 4                 # attn maps (f32)
                         + 4 * C * C * 2                             # bf16 weights
                         + 4 * C * 4)                                # f32 biases
    cost = pl.CostEstimate(flops=flops, transcendentals=transcendentals,
                           bytes_accessed=bytes_accessed)

    out, attn = pl.pallas_call(
        kern,
        grid=(B,),
        in_specs=in_specs,
        out_specs=out_specs,
        out_shape=out_shape,
        cost_estimate=cost,
        compiler_params=pltpu.CompilerParams(
            dimension_semantics=("parallel",),
            vmem_limit_bytes=32 * 1024 * 1024),
    )(x, wqkv, bqkv, wproj, bproj)

    state = {"attn": attn}
    return out, state


# ------------------------------- pure-JAX reference -------------------------------
# Mirrors the kernel's mixed precision (bf16 matmul operands, f32 accumulation) so the
# tolerance check is tight; softmax division is exact here (kernel uses approx recip).

def ref_attention(x, p, num_heads):
    B, N, C = x.shape
    hd = C // num_heads
    scale = hd ** -0.5
    f32 = jnp.float32
    bf = lambda a: a.astype(jnp.bfloat16)

    q = jnp.einsum('bnc,ck->bnk', bf(x), bf(p["q_w"]), preferred_element_type=f32) + p["q_b"][0]
    k = jnp.einsum('bnc,ck->bnk', bf(x), bf(p["k_w"]), preferred_element_type=f32) + p["k_b"][0]
    v = jnp.einsum('bnc,ck->bnk', bf(x), bf(p["v_w"]), preferred_element_type=f32) + p["v_b"][0]
    q = q.reshape(B, N, num_heads, hd).transpose(0, 2, 1, 3)
    k = k.reshape(B, N, num_heads, hd).transpose(0, 2, 1, 3)
    v = v.reshape(B, N, num_heads, hd).transpose(0, 2, 1, 3)
    s = jnp.einsum('bhqd,bhkd->bhqk', bf(q * scale), bf(k), preferred_element_type=f32)
    attn = jax.nn.softmax(s, axis=-1)
    o = jnp.einsum('bhqk,bhkd->bhqd', bf(attn), bf(v), preferred_element_type=f32)
    o = o.transpose(0, 2, 1, 3).reshape(B, N, C)
    o = jnp.einsum('bnc,cd->bnd', bf(o), bf(p["proj_w"]), preferred_element_type=f32) + p["proj_b"][0]
    return o, attn


# ------------------------------------ params --------------------------------------

def init_params(key, C):
    def lin(k, fi, fo):
        kw, kb = jax.random.split(k)
        bound = 1.0 / math.sqrt(fi)
        w = jax.random.uniform(kw, (fi, fo), jnp.float32, -bound, bound)
        b = jax.random.uniform(kb, (1, fo), jnp.float32, -bound, bound)
        return w, b

    key, *ks = jax.random.split(key, 5)
    q_w, q_b = lin(ks[0], C, C)
    k_w, k_b = lin(ks[1], C, C)
    v_w, v_b = lin(ks[2], C, C)
    p_w, p_b = lin(ks[3], C, C)
    return dict(q_w=q_w, q_b=q_b, k_w=k_w, k_b=k_b, v_w=v_w, v_b=v_b,
                proj_w=p_w, proj_b=p_b)


# ------------------------------------- main ----------------------------------------

if __name__ == "__main__":
    # Small config: batch=2, seq_len=8, embed_dim=32, heads=4 (head_dim=8)
    B, N, C, NH = 2, 8, 32, 4

    key = jax.random.PRNGKey(0)
    key, xk = jax.random.split(key)
    x = jax.random.normal(xk, (B, N, C), jnp.float32)
    params = init_params(key, C)

    fwd = jax.jit(functools.partial(attention_forward, num_heads=NH))
    out, state = fwd(x, params)
    jax.block_until_ready(out)
    jax.block_until_ready(state["attn"])

    # correctness check against plain-JAX mixed-precision reference
    ref_out, ref_attn = ref_attention(x, params, NH)
    assert out.shape == (B, N, C)
    assert state["attn"].shape == (B, NH, N, N)
    assert jnp.allclose(out, ref_out, atol=1e-2, rtol=2e-2)
    assert jnp.allclose(state["attn"], ref_attn, atol=1e-2, rtol=2e-2)

    print("KERNEL_OK")
</pallas_src>

<mosaic_0001>
module attributes {stable_mosaic.version = 11 : i64} {
  func.func @attention_kernel(%arg0: i32, %arg1: memref<1x8x32xf32, #tpu.memory_space<vmem>>, %arg2: memref<4x32x24xbf16, #tpu.memory_space<vmem>>, %arg3: memref<4x1x24xf32, #tpu.memory_space<vmem>>, %arg4: memref<4x8x32xbf16, #tpu.memory_space<vmem>>, %arg5: memref<1x32xf32, #tpu.memory_space<vmem>>, %arg6: memref<1x8x32xf32, #tpu.memory_space<vmem>>, %arg7: memref<1x4x8x8xf32, #tpu.memory_space<vmem>>) attributes {dimension_semantics = [#tpu.dimension_semantics<parallel>], iteration_bounds = array<i64: 2>, scalar_prefetch = 0 : i64, scratch_operands = 0 : i64, tpu.core_type = #tpu.core_type<tc>, window_params = [{transform_indices = @transform_0, window_bounds = array<i64: 1, 8, 32>}, {pipeline_mode = #tpu.pipeline_mode<synchronous>, transform_indices = @transform_1, window_bounds = array<i64: 4, 32, 24>}, {pipeline_mode = #tpu.pipeline_mode<synchronous>, transform_indices = @transform_2, window_bounds = array<i64: 4, 1, 24>}, {pipeline_mode = #tpu.pipeline_mode<synchronous>, transform_indices = @transform_3, window_bounds = array<i64: 4, 8, 32>}, {pipeline_mode = #tpu.pipeline_mode<synchronous>, transform_indices = @transform_4, window_bounds = array<i64: 1, 32>}, {transform_indices = @transform_5, window_bounds = array<i64: 1, 8, 32>}, {transform_indices = @transform_6, window_bounds = array<i64: 1, 4, 8, 8>}]} {
    %c0 = arith.constant 0 : index
    %c0_0 = arith.constant 0 : index
    %c0_1 = arith.constant 0 : index
    %0 = vector.load %arg1[%c0, %c0_0, %c0_1] : memref<1x8x32xf32, #tpu.memory_space<vmem>>, vector<1x8x32xf32>
    %1 = vector.shape_cast %0 : vector<1x8x32xf32> to vector<8x32xf32>
    %2 = arith.truncf %1 : vector<8x32xf32> to vector<8x32xbf16>
    %3 = vector.shape_cast %2 : vector<8x32xbf16> to vector<1x8x32xbf16>
    %4 = vector.broadcast %3 : vector<1x8x32xbf16> to vector<4x8x32xbf16>
    %c0_2 = arith.constant 0 : index
    %c0_3 = arith.constant 0 : index
    %c0_4 = arith.constant 0 : index
    %5 = vector.load %arg2[%c0_2, %c0_3, %c0_4] : memref<4x32x24xbf16, #tpu.memory_space<vmem>>, vector<4x32x24xbf16>
    "tpu.trace_start"() <{level = 10 : i32, message = "hnc,hck->hnk"}> : () -> ()
    %cst = arith.constant dense<0.000000e+00> : vector<4x8x24xf32>
    %6 = tpu.matmul %4, %5, %cst {dimension_numbers = #tpu.dot_dimension_numbers<[2], [1], [1], [2], [0, 0, 0, 1, 1, 2], [0], [0]>} : vector<4x8x32xbf16>, vector<4x32x24xbf16>, vector<4x8x24xf32> -> vector<4x8x24xf32>
    "tpu.trace_stop"() : () -> ()
    %c0_5 = arith.constant 0 : index
    %c0_6 = arith.constant 0 : index
    %c0_7 = arith.constant 0 : index
    %7 = vector.load %arg3[%c0_5, %c0_6, %c0_7] : memref<4x1x24xf32, #tpu.memory_space<vmem>>, vector<4x1x24xf32>
    %8 = vector.broadcast %7 : vector<4x1x24xf32> to vector<4x8x24xf32>
    %9 = arith.addf %6, %8 : vector<4x8x24xf32>
    %10 = vector.extract_strided_slice %9 {offsets = [0, 0, 0], sizes = [4, 8, 8], strides = [1, 1, 1]} : vector<4x8x24xf32> to vector<4x8x8xf32>
    %cst_8 = arith.constant 0.353553385 : f32
    %11 = vector.broadcast %cst_8 : f32 to vector<4x8x8xf32>
    %12 = arith.mulf %10, %11 : vector<4x8x8xf32>
    %13 = vector.extract_strided_slice %9 {offsets = [0, 0, 8], sizes = [4, 8, 8], strides = [1, 1, 1]} : vector<4x8x24xf32> to vector<4x8x8xf32>
    %14 = vector.extract_strided_slice %9 {offsets = [0, 0, 16], sizes = [4, 8, 8], strides = [1, 1, 1]} : vector<4x8x24xf32> to vector<4x8x8xf32>
    %15 = arith.truncf %12 : vector<4x8x8xf32> to vector<4x8x8xbf16>
    %16 = arith.truncf %13 : vector<4x8x8xf32> to vector<4x8x8xbf16>
    "tpu.trace_start"() <{level = 10 : i32, message = "hqd,hkd->hqk"}> : () -> ()
    %cst_9 = arith.constant dense<0.000000e+00> : vector<4x8x8xf32>
    %17 = tpu.matmul %15, %16, %cst_9 {dimension_numbers = #tpu.dot_dimension_numbers<[2], [2], [1], [1], [0, 0, 0, 1, 1, 1], [0], [0]>} : vector<4x8x8xbf16>, vector<4x8x8xbf16>, vector<4x8x8xf32> -> vector<4x8x8xf32>
    "tpu.trace_stop"() : () -> ()
    %cst_10 = arith.constant dense<0xFF800000> : vector<4x8xf32>
    %18 = vector.multi_reduction <maximumf>, %17, %cst_10 [2] : vector<4x8x8xf32> to vector<4x8xf32>
    %19 = vector.shape_cast %18 : vector<4x8xf32> to vector<4x8x1xf32>
    %20 = vector.broadcast %19 : vector<4x8x1xf32> to vector<4x8x8xf32>
    %21 = arith.subf %17, %20 : vector<4x8x8xf32>
    %22 = math.exp %21 : vector<4x8x8xf32>
    %cst_11 = arith.constant dense<0.000000e+00> : vector<4x8xf32>
    %23 = vector.multi_reduction <add>, %22, %cst_11 [2] : vector<4x8x8xf32> to vector<4x8xf32>
    %24 = vector.shape_cast %23 : vector<4x8xf32> to vector<4x8x1xf32>
    %25 = tpu.reciprocal %24 {approx = true} : vector<4x8x1xf32> -> vector<4x8x1xf32>
    %26 = vector.broadcast %25 : vector<4x8x1xf32> to vector<4x8x8xf32>
    %27 = arith.mulf %22, %26 : vector<4x8x8xf32>
    %c0_12 = arith.constant 0 : index
    %c0_13 = arith.constant 0 : index
    %c0_14 = arith.constant 0 : index
    %c0_15 = arith.constant 0 : index
    %28 = vector.load %arg7[%c0_12, %c0_13, %c0_14, %c0_15] : memref<1x4x8x8xf32, #tpu.memory_space<vmem>>, vector<1x4x8x8xf32>
    %29 = vector.shape_cast %28 : vector<1x4x8x8xf32> to vector<4x8x8xf32>
    %30 = vector.shape_cast %27 : vector<4x8x8xf32> to vector<1x4x8x8xf32>
    tpu.vector_store %arg7[%c0_12, %c0_13, %c0_14, %c0_15], %30 {strides = array<i32>} : memref<1x4x8x8xf32, #tpu.memory_space<vmem>>, vector<1x4x8x8xf32>,
    %31 = arith.truncf %27 : vector<4x8x8xf32> to vector<4x8x8xbf16>
    %32 = arith.truncf %14 : vector<4x8x8xf32> to vector<4x8x8xbf16>
    "tpu.trace_start"() <{level = 10 : i32, message = "hqk,hkd->hqd"}> : () -> ()
    %cst_16 = arith.constant dense<0.000000e+00> : vector<4x8x8xf32>
    %33 = tpu.matmul %31, %32, %cst_16 {dimension_numbers = #tpu.dot_dimension_numbers<[2], [1], [1], [2], [0, 0, 0, 1, 1, 2], [0], [0]>} : vector<4x8x8xbf16>, vector<4x8x8xbf16>, vector<4x8x8xf32> -> vector<4x8x8xf32>
    "tpu.trace_stop"() : () -> ()
    %34 = arith.truncf %33 : vector<4x8x8xf32> to vector<4x8x8xbf16>
    %c0_17 = arith.constant 0 : index
    %c0_18 = arith.constant 0 : index
    %c0_19 = arith.constant 0 : index
    %35 = vector.load %arg4[%c0_17, %c0_18, %c0_19] : memref<4x8x32xbf16, #tpu.memory_space<vmem>>, vector<4x8x32xbf16>
    "tpu.trace_start"() <{level = 10 : i32, message = "hnd,hdc->hnc"}> : () -> ()
    %cst_20 = arith.constant dense<0.000000e+00> : vector<4x8x32xf32>
    %36 = tpu.matmul %34, %35, %cst_20 {dimension_numbers = #tpu.dot_dimension_numbers<[2], [1], [1], [2], [0, 0, 0, 1, 1, 2], [0], [0]>} : vector<4x8x8xbf16>, vector<4x8x32xbf16>, vector<4x8x32xf32> -> vector<4x8x32xf32>
    "tpu.trace_stop"() : () -> ()
    %cst_21 = arith.constant dense<0.000000e+00> : vector<8x32xf32>
    %37 = vector.multi_reduction <add>, %36, %cst_21 [0] : vector<4x8x32xf32> to vector<8x32xf32>
    %c0_22 = arith.constant 0 : index
    %c0_23 = arith.constant 0 : index
    %38 = vector.load %arg5[%c0_22, %c0_23] : memref<1x32xf32, #tpu.memory_space<vmem>>, vector<1x32xf32>
    %39 = vector.shape_cast %38 : vector<1x32xf32> to vector<32xf32>
    %40 = vector.shape_cast %39 : vector<32xf32> to vector<1x32xf32>
    %41 = vector.broadcast %40 : vector<1x32xf32> to vector<8x32xf32>
    %42 = arith.addf %37, %41 : vector<8x32xf32>
    %c0_24 = arith.constant 0 : index
    %c0_25 = arith.constant 0 : index
    %c0_26 = arith.constant 0 : index
    %43 = vector.load %arg6[%c0_24, %c0_25, %c0_26] : memref<1x8x32xf32, #tpu.memory_space<vmem>>, vector<1x8x32xf32>
    %44 = vector.shape_cast %43 : vector<1x8x32xf32> to vector<8x32xf32>
    %45 = vector.shape_cast %42 : vector<8x32xf32> to vector<1x8x32xf32>
    tpu.vector_store %arg6[%c0_24, %c0_25, %c0_26], %45 {strides = array<i32>} : memref<1x8x32xf32, #tpu.memory_space<vmem>>, vector<1x8x32xf32>,
    return
  }
  func.func @transform_0(%arg0: i32) -> (i32, i32, i32) {
    %c0_i32 = arith.constant 0 : i32
    %c0_i32_0 = arith.constant 0 : i32
    %c0_i32_1 = arith.constant 0 : i32
    return %arg0, %c0_i32, %c0_i32_0 : i32, i32, i32
  }
  func.func @transform_1(%arg0: i32) -> (i32, i32, i32) {
    %c0_i32 = arith.constant 0 : i32
    %c0_i32_0 = arith.constant 0 : i32
    %c0_i32_1 = arith.constant 0 : i32
    %c0_i32_2 = arith.constant 0 : i32
    return %c0_i32, %c0_i32_0, %c0_i32_1 : i32, i32, i32
  }
  func.func @transform_2(%arg0: i32) -> (i32, i32, i32) {
    %c0_i32 = arith.constant 0 : i32
    %c0_i32_0 = arith.constant 0 : i32
    %c0_i32_1 = arith.constant 0 : i32
    %c0_i32_2 = arith.constant 0 : i32
    return %c0_i32, %c0_i32_0, %c0_i32_1 : i32, i32, i32
  }
  func.func @transform_3(%arg0: i32) -> (i32, i32, i32) {
    %c0_i32 = arith.constant 0 : i32
    %c0_i32_0 = arith.constant 0 : i32
    %c0_i32_1 = arith.constant 0 : i32
    %c0_i32_2 = arith.constant 0 : i32
    return %c0_i32, %c0_i32_0, %c0_i32_1 : i32, i32, i32
  }
  func.func @transform_4(%arg0: i32) -> (i32, i32) {
    %c0_i32 = arith.constant 0 : i32
    %c0_i32_0 = arith.constant 0 : i32
    %c0_i32_1 = arith.constant 0 : i32
    return %c0_i32, %c0_i32_0 : i32, i32
  }
  func.func @transform_5(%arg0: i32) -> (i32, i32, i32) {
    %c0_i32 = arith.constant 0 : i32
    %c0_i32_0 = arith.constant 0 : i32
    %c0_i32_1 = arith.constant 0 : i32
    return %arg0, %c0_i32, %c0_i32_0 : i32, i32, i32
  }
  func.func @transform_6(%arg0: i32) -> (i32, i32, i32, i32) {
    %c0_i32 = arith.constant 0 : i32
    %c0_i32_0 = arith.constant 0 : i32
    %c0_i32_1 = arith.constant 0 : i32
    %c0_i32_2 = arith.constant 0 : i32
    return %arg0, %c0_i32, %c0_i32_0, %c0_i32_1 : i32, i32, i32, i32
  }
}

</mosaic_0001>

<llo_original>
// kernel: attention_forward.1
$region0: #{attention_forward.1}
  #allocation0 [shape = 'u32[]', space=smem, size = 0x4, offset = 0x4, fixed_abs, tag = 'smem constant byte address 0x4 - core index']
  #allocation1 [shape = 'u32[144,128]{1,0:T(1,128)}', space=vmem, size = 0x12000, scoped, tag = 'internal scratch']
  %s0 = inlined_call_operand.vmem [shape: f32[2,8,32], index: 0, kind: input, shape index: {}]
  %s1 = inlined_call_operand.vmem [shape: bf16[4,32,24], index: 1, kind: input, shape index: {}]
  %s2 = inlined_call_operand.vmem [shape: f32[4,1,24], index: 2, kind: input, shape index: {}]
  %s3 = inlined_call_operand.vmem [shape: bf16[4,8,32], index: 3, kind: input, shape index: {}]
  %s4 = inlined_call_operand.vmem [shape: f32[1,32], index: 4, kind: input, shape index: {}]
  %s5 = inlined_call_operand.hbm [shape: f32[2,8,32], index: 5, kind: output, shape index: {0}]
  %s6 = inlined_call_operand.hbm [shape: f32[2,4,8,8], index: 6, kind: output, shape index: {1}]
  %7 = xla_tuple %s5, %s6
  %s8 = sld [smem:[#allocation0]]
  $region61: #{attention_forward.1} parent=0
    _
  %s10 = ssub.s32 1, %s8
  %s11 = scalar_select 0, %s10, %s8
  $region1: #{attention_forward.1} parent=0
    #allocation2 [shape = 'u8[8192]{0}', space=vmem, size = 0x2000, scoped, tag = 'output window, operand 0']
    #allocation3 [shape = 's32[2]{0}', space=sflag, size = 0x8, scoped, tag = 'scoped memory for attention_forward.1']
    #allocation4 [shape = 'u8[32768]{0}', space=vmem, size = 0x8000, scoped, tag = 'output window, operand 1']
    #allocation5 [shape = 's32[2]{0}', space=sflag, size = 0x8, scoped, tag = 'scoped memory for attention_forward.1']
    %12 = vsyncpa [#allocation3], 0
    %s13 = scalar_lea.sflag [#allocation3], 1
    %14 = vsyncpa %s13, 0
    %15 = vsyncpa [#allocation5], 0
    %s16 = scalar_lea.sflag [#allocation5], 1
    %17 = vsyncpa %s16, 0
    loop: start=0, step=1, limit=4
    $region2: #{attention_forward.1} parent=1 // loop_pre_header
      _
    $region3: #{attention_forward.1} parent=1 // loop_header
      %s19 = sphi 0, %s23
      %p20 = scmp.ge.s32.totalorder %s19, 4
      %s29 = sphi 0, %s31
      %s32 = sphi 0, %s29
      %s33 = sphi 0, %s32
      %s49 = sphi 0, %s33
      %s53 = sphi 0, %s53
      %s55 = sphi 0, %s53
      %s56 = sphi 0, %s55
      %s70 = sphi 0, %s56
      %s74 = sphi 0, %s74
      %s76 = sphi 0, %s74
      %s77 = sphi 0, %s76
      %s91 = sphi 0, %s77
      %s95 = sphi 0, %s95
      %s97 = sphi 0, %s95
      %s98 = sphi 0, %s97
      %s112 = sphi 0, %s98
      %s116 = sphi 0, %s116
      %s118 = sphi 0, %s116
      %s119 = sphi 0, %s118
      %s133 = sphi 0, %s119
      %s139 = sphi 0, %s141
      %s142 = sphi 0, %s139
      %s143 = sphi 0, %s142
      %s159 = sphi 0, %s143
      %s165 = sphi 0, %s167
      %s168 = sphi 0, %s165
      %s169 = sphi 0, %s168
      %s185 = sphi 0, %s169
    $region4: #{attention_forward.1} parent=1 // loop_header_branch
      %22 = sbr.rel (%p20) target = $region8
    $region5: #{attention_forward.1} parent=1 // loop_body
      %s24 = ssub.s32 %s19, 1
      %s25 = ssub.s32 %s19, 2
      %s26 = sadd.s32 %s19, 1
      %s27 = ssub.s32 %s19, %s26
      %p28 = scmp.eq.s32.totalorder %s27, 0
      %s30 = sadd.s32 %s29, 1
      %s31 = scalar_select %p28, %s29, %s30
      %p34 = pneg %p28
      %p35 = scmp.eq.s32.totalorder %s19, 1
      %p36 = por %p34, %p35
      %p37 = scmp.ne.s32.totalorder %s29, %s32
      %p38 = scmp.eq.s32.totalorder %s19, 0
      %p39 = por %p37, %p38
      %p40 = scmp.ne.s32.totalorder %s29, %s32
      %p41 = scmp.eq.s32.totalorder %s24, 1
      %p42 = por %p40, %p41
      %p43 = scmp.ne.s32.totalorder %s32, %s33
      %p44 = scmp.eq.s32.totalorder %s24, 0
      %p45 = por %p43, %p44
      %p46 = scmp.ne.s32.totalorder %s32, %s33
      %p47 = scmp.eq.s32.totalorder %s25, 1
      %p48 = por %p46, %p47
      %p50 = scmp.ne.s32.totalorder %s33, %s49
      %p51 = scmp.eq.s32.totalorder %s25, 0
      %p52 = por %p50, %p51
      %s54 = sadd.s32 %s53, 1
      %p57 = scmp.eq.s32.totalorder %s19, 1
      %p58 = scmp.ne.s32.totalorder %s53, %s55
      %p59 = scmp.eq.s32.totalorder %s19, 0
      %p60 = por %p58, %p59
      %p61 = scmp.ne.s32.totalorder %s53, %s55
      %p62 = scmp.eq.s32.totalorder %s24, 1
      %p63 = por %p61, %p62
      %p64 = scmp.ne.s32.totalorder %s55, %s56
      %p65 = scmp.eq.s32.totalorder %s24, 0
      %p66 = por %p64, %p65
      %p67 = scmp.ne.s32.totalorder %s55, %s56
      %p68 = scmp.eq.s32.totalorder %s25, 1
      %p69 = por %p67, %p68
      %p71 = scmp.ne.s32.totalorder %s56, %s70
      %p72 = scmp.eq.s32.totalorder %s25, 0
      %p73 = por %p71, %p72
      %s75 = sadd.s32 %s74, 1
      %p78 = scmp.eq.s32.totalorder %s19, 1
      %p79 = scmp.ne.s32.totalorder %s74, %s76
      %p80 = scmp.eq.s32.totalorder %s19, 0
      %p81 = por %p79, %p80
      %p82 = scmp.ne.s32.totalorder %s74, %s76
      %p83 = scmp.eq.s32.totalorder %s24, 1
      %p84 = por %p82, %p83
      %p85 = scmp.ne.s32.totalorder %s76, %s77
      %p86 = scmp.eq.s32.totalorder %s24, 0
      %p87 = por %p85, %p86
      %p88 = scmp.ne.s32.totalorder %s76, %s77
      %p89 = scmp.eq.s32.totalorder %s25, 1
      %p90 = por %p88, %p89
      %p92 = scmp.ne.s32.totalorder %s77, %s91
      %p93 = scmp.eq.s32.totalorder %s25, 0
      %p94 = por %p92, %p93
      %s96 = sadd.s32 %s95, 1
      %p99 = scmp.eq.s32.totalorder %s19, 1
      %p100 = scmp.ne.s32.totalorder %s95, %s97
      %p101 = scmp.eq.s32.totalorder %s19, 0
      %p102 = por %p100, %p101
      %p103 = scmp.ne.s32.totalorder %s95, %s97
      %p104 = scmp.eq.s32.totalorder %s24, 1
      %p105 = por %p103, %p104
      %p106 = scmp.ne.s32.totalorder %s97, %s98
      %p107 = scmp.eq.s32.totalorder %s24, 0
      %p108 = por %p106, %p107
      %p109 = scmp.ne.s32.totalorder %s97, %s98
      %p110 = scmp.eq.s32.totalorder %s25, 1
      %p111 = por %p109, %p110
      %p113 = scmp.ne.s32.totalorder %s98, %s112
      %p114 = scmp.eq.s32.totalorder %s25, 0
      %p115 = por %p113, %p114
      %s117 = sadd.s32 %s116, 1
      %p120 = scmp.eq.s32.totalorder %s19, 1
      %p121 = scmp.ne.s32.totalorder %s116, %s118
      %p122 = scmp.eq.s32.totalorder %s19, 0
      %p123 = por %p121, %p122
      %p124 = scmp.ne.s32.totalorder %s116, %s118
      %p125 = scmp.eq.s32.totalorder %s24, 1
      %p126 = por %p124, %p125
      %p127 = scmp.ne.s32.totalorder %s118, %s119
      %p128 = scmp.eq.s32.totalorder %s24, 0
      %p129 = por %p127, %p128
      %p130 = scmp.ne.s32.totalorder %s118, %s119
      %p131 = scmp.eq.s32.totalorder %s25, 1
      %p132 = por %p130, %p131
      %p134 = scmp.ne.s32.totalorder %s119, %s133
      %p135 = scmp.eq.s32.totalorder %s25, 0
      %p136 = por %p134, %p135
      %s137 = ssub.s32 %s19, %s26
      %p138 = scmp.eq.s32.totalorder %s137, 0
      %s140 = sadd.s32 %s139, 1
      %s141 = scalar_select %p138, %s139, %s140
      %p144 = pneg %p138
      %p145 = scmp.eq.s32.totalorder %s19, 1
      %p146 = por %p144, %p145
      %p147 = scmp.ne.s32.totalorder %s139, %s142
      %p148 = scmp.eq.s32.totalorder %s19, 0
      %p149 = por %p147, %p148
      %p150 = scmp.ne.s32.totalorder %s139, %s142
      %p151 = scmp.eq.s32.totalorder %s24, 1
      %p152 = por %p150, %p151
      %p153 = scmp.ne.s32.totalorder %s142, %s143
      %p154 = scmp.eq.s32.totalorder %s24, 0
      %p155 = por %p153, %p154
      %p156 = scmp.ne.s32.totalorder %s142, %s143
      %p157 = scmp.eq.s32.totalorder %s25, 1
      %p158 = por %p156, %p157
      %p160 = scmp.ne.s32.totalorder %s143, %s159
      %p161 = scmp.eq.s32.totalorder %s25, 0
      %p162 = por %p160, %p161
      %s163 = ssub.s32 %s19, %s26
      %p164 = scmp.eq.s32.totalorder %s163, 0
      %s166 = sadd.s32 %s165, 1
      %s167 = scalar_select %p164, %s165, %s166
      %p170 = pneg %p164
      %p171 = scmp.eq.s32.totalorder %s19, 1
      %p172 = por %p170, %p171
      %p173 = scmp.ne.s32.totalorder %s165, %s168
      %p174 = scmp.eq.s32.totalorder %s19, 0
      %p175 = por %p173, %p174
      %p176 = scmp.ne.s32.totalorder %s165, %s168
      %p177 = scmp.eq.s32.totalorder %s24, 1
      %p178 = por %p176, %p177
      %p179 = scmp.ne.s32.totalorder %s168, %s169
      %p180 = scmp.eq.s32.totalorder %s24, 0
      %p181 = por %p179, %p180
      %p182 = scmp.ne.s32.totalorder %s168, %s169
      %p183 = scmp.eq.s32.totalorder %s25, 1
      %p184 = por %p182, %p183
      %p186 = scmp.ne.s32.totalorder %s169, %s185
      %p187 = scmp.eq.s32.totalorder %s25, 0
      %p188 = por %p186, %p187
      %p189 = scmp.le.s32.totalorder 1, %s19
      %p190 = scmp.lt.s32.totalorder %s19, 3
      %p191 = pnand %p189, %p190
      %p192 = pneg %p191
      // Predicated region
      $region9: #{attention_forward.1} parent=5 // pred_check
        _
      $region10: #{attention_forward.1} parent=5 // pred_check_branch
        %194 = sbr.rel (%p191) target = $region12
      $region11: #{attention_forward.1} parent=5 // pred_region
        %s195 = ssub.s32 %s19, 1
        // Predicated region
        $region13: #{attention_forward.1} parent=11 // pred_check
          %p196 = pneg %p66
        $region14: #{attention_forward.1} parent=11 // pred_check_branch
          %198 = sbr.rel (%p196) target = $region16
        $region15: #{attention_forward.1} parent=11 // pred_region
          _
        $region16: #{attention_forward.1} parent=11 // pred_fallthru
          _
        // Predicated region
        $region17: #{attention_forward.1} parent=11 // pred_check
          %p199 = pneg %p87
        $region18: #{attention_forward.1} parent=11 // pred_check_branch
          %201 = sbr.rel (%p199) target = $region20
        $region19: #{attention_forward.1} parent=11 // pred_region
          _
        $region20: #{attention_forward.1} parent=11 // pred_fallthru
          _
        // Predicated region
        $region21: #{attention_forward.1} parent=11 // pred_check
          %p202 = pneg %p108
        $region22: #{attention_forward.1} parent=11 // pred_check_branch
          %204 = sbr.rel (%p202) target = $region24
        $region23: #{attention_forward.1} parent=11 // pred_region
          _
        $region24: #{attention_forward.1} parent=11 // pred_fallthru
          _
        // Predicated region
        $region25: #{attention_forward.1} parent=11 // pred_check
          %p205 = pneg %p129
        $region26: #{attention_forward.1} parent=11 // pred_check_branch
          %207 = sbr.rel (%p205) target = $region28
        $region27: #{attention_forward.1} parent=11 // pred_region
          _
        $region28: #{attention_forward.1} parent=11 // pred_fallthru
          _
      $region12: #{attention_forward.1} parent=5 // pred_fallthru
        _
      %p208 = scmp.lt.s32.totalorder %s19, 2
      // Predicated region
      $region29: #{attention_forward.1} parent=5 // pred_check
        %p209 = pneg %p208
      $region30: #{attention_forward.1} parent=5 // pred_check_branch
        %211 = sbr.rel (%p209) target = $region32
      $region31: #{attention_forward.1} parent=5 // pred_region
        // Predicated region
        $region33: #{attention_forward.1} parent=31 // pred_check
          %p212 = pneg %p39
        $region34: #{attention_forward.1} parent=31 // pred_check_branch
          %214 = sbr.rel (%p212) target = $region36
        $region35: #{attention_forward.1} parent=31 // pred_region
          %p215 = scmp.lt.s32.totalorder %s19, 1
          %s216 = scalar_select %p215, %s19, 1
          %s217 = smul.addr %s216, 8
          %s218 = scalar_lea.vmem %s0, %s217
        $region36: #{attention_forward.1} parent=31 // pred_fallthru
          _
      $region32: #{attention_forward.1} parent=5 // pred_fallthru
        _
      %p219 = scmp.le.s32.totalorder 1, %s19
      %p220 = scmp.lt.s32.totalorder %s19, 3
      %p221 = pnand %p219, %p220
      %p222 = pneg %p221
      // Predicated region
      $region37: #{attention_forward.1} parent=5 // pred_check
        _
      $region38: #{attention_forward.1} parent=5 // pred_check_branch
        %224 = sbr.rel (%p221) target = $region40
      $region39: #{attention_forward.1} parent=5 // pred_region
        %s225 = ssub.s32 %s19, 1
        %p226 = scmp.lt.s32.totalorder %s24, 1
        %s227 = scalar_select %p226, %s24, 1
        %s228 = smul.addr %s227, 8
        %s229 = scalar_lea.vmem %s0, %s228
        %p230 = pneg %p45
        %p231 = pneg %p42
        %p232 = pneg %p66
        %p233 = pneg %p63
        %p234 = pneg %p87
        %p235 = pneg %p84
        %p236 = pneg %p108
        %p237 = pneg %p105
        %p238 = pneg %p129
        %p239 = pneg %p126
        %p240 = pneg %p155
        %p241 = pneg %p152
        %s242 = sand.u32 %s142, 1
        %s243 = scalar_lea.sflag [#allocation3], %s242
        %s244 = sand.u32 %s142, 1
        %s245 = smul.addr %s244, 8
        %s246 = scalar_lea.vmem [#allocation2], %s245
        %p247 = pneg %p181
        %p248 = pneg %p178
        %s249 = sand.u32 %s168, 1
        %s250 = scalar_lea.sflag [#allocation5], %s249
        %s251 = sand.u32 %s168, 1
        %s252 = smul.addr %s251, 32
        %s253 = scalar_lea.vmem [#allocation4], %s252
        %p254 = scmp.lt.s32.totalorder %s24, 1
        %s255 = scalar_select %p254, %s24, 1
        %s256 = smul.addr %s255, 8
        %s257 = scalar_lea.vmem %s0, %s256
        %v259 = vld [vmem:[%s257] sm:$0xff]
        %v260 = vpack.c.bf16 %v259, %v259
        %v261 = vld [vmem:[%s1] sm:$0xf]
        %v262 = vld [vmem:[%s1 + $0x4] sm:$0xf]
        %v263 = vld [vmem:[%s1 + $0x8] sm:$0xf]
        %v264 = vld [vmem:[%s1 + $0xc] sm:$0xf]
        %v265 = vld [vmem:[%s1 + $0x10] sm:$0xf]
        %v266 = vld [vmem:[%s1 + $0x14] sm:$0xf]
        %v267 = vld [vmem:[%s1 + $0x18] sm:$0xf]
        %v268 = vld [vmem:[%s1 + $0x1c] sm:$0xf]
        %v269 = vld [vmem:[%s1 + $0x20] sm:$0xf]
        %v270 = vld [vmem:[%s1 + $0x24] sm:$0xf]
        %v271 = vld [vmem:[%s1 + $0x28] sm:$0xf]
        %v272 = vld [vmem:[%s1 + $0x2c] sm:$0xf]
        %v273 = vld [vmem:[%s1 + $0x30] sm:$0xf]
        %v274 = vld [vmem:[%s1 + $0x34] sm:$0xf]
        %v275 = vld [vmem:[%s1 + $0x38] sm:$0xf]
        %v276 = vld [vmem:[%s1 + $0x3c] sm:$0xf]
        %v277 = vld [vmem:[%s2] sm:$0x1]
        %v278 = vld [vmem:[%s2 + $0x1] sm:$0x1]
        %v279 = vld [vmem:[%s2 + $0x2] sm:$0x1]
        %v280 = vld [vmem:[%s2 + $0x3] sm:$0x1]
        %v285 = vlaneseq
        %v286 = vshrl.u32 %v285, 7
        %v287 = vsub.s32 0, %v286
        %v288 = vrot.slane %v277, %v287
        %v289 = vlaneseq
        %v290 = vshrl.u32 %v289, 7
        %v291 = vsub.s32 0, %v290
        %v292 = vrot.slane %v278, %v291
        %v293 = vlaneseq
        %v294 = vshrl.u32 %v293, 7
        %v295 = vsub.s32 0, %v294
        %v296 = vrot.slane %v279, %v295
        %v297 = vlaneseq
        %v298 = vshrl.u32 %v297, 7
        %v299 = vsub.s32 0, %v298
        %v300 = vrot.slane %v280, %v299
        %v309 = vunpack.c.l.b16 %v261
        %v310 = vunpack.c.l.b16 %v262
        %v311 = vunpack.c.l.b16 %v263
        %v312 = vunpack.c.l.b16 %v264
        %v313 = vpack.c.b16 %v310, %v309
        %v314 = vpack.c.b16 %v312, %v311
        %vm317 = vcmask 261120
        %v319 = vsel %vm317, %v260, 0
        %321 = vmatprep.subr.bf16.mxu0 0
        %322 = vmatpush1.bf16.msra.mxu0 %v313
        %323 = vmatprep.subr.bf16.mxu0 0
        %324 = vmatpush1.bf16.msra.mxu0 %v314
        %325 = vmatprep.subr.bf16.mxu0 0
        %326 = vmatpush1.bf16.msra.mxu0 0
        %327 = vmatprep.subr.bf16.mxu0 0
        %328 = vmatpush1.bf16.msra.mxu0 0
        %329 = vmatprep.subr.bf16.mxu0 0
        %330 = vmatpush1.bf16.msra.mxu0 0
        %331 = vmatprep.subr.bf16.mxu0 0
        %332 = vmatpush1.bf16.msra.mxu0 0
        %333 = vmatprep.subr.bf16.mxu0 0
        %334 = vmatpush1.bf16.msra.mxu0 0
        %335 = vmatprep.subr.bf16.mxu0 0
        %336 = vmatpush1.bf16.msra.mxu0 0
        %337 = vmatprep.subr.bf16.mxu0 0
        %338 = vmatpush1.bf16.msra.mxu0 0
        %339 = vmatprep.subr.bf16.mxu0 0
        %340 = vmatpush1.bf16.msra.mxu0 0
        %341 = vmatprep.subr.bf16.mxu0 0
        %342 = vmatpush1.bf16.msra.mxu0 0
        %343 = vmatprep.subr.bf16.mxu0 0
        %344 = vmatpush1.bf16.msra.mxu0 0
        %345 = vmatprep.subr.bf16.mxu0 0
        %346 = vmatpush1.bf16.msra.mxu0 0
        %347 = vmatprep.subr.bf16.mxu0 0
        %348 = vmatpush1.bf16.msra.mxu0 0
        %349 = vmatprep.subr.bf16.mxu0 0
        %350 = vmatpush1.bf16.msra.mxu0 0
        %351 = vmatprep.subr.bf16.mxu0 0
        %352 = vmatpush1.bf16.msra.mxu0 0
        %353 = vmatprep.mubr.bf16.mxu0 0
        %354 = vmatmul.mubr.bf16.gmra.mrb[0].mxu0 %v319
        %v355 = vpop.f32.mrb[0].mxu0
        %v356 = vadd.f32 %v288, %v355
        %v357 = vpop.f32.mrb[0].mxu0
        %v358 = vpop.f32.mrb[0].mxu0
        %v359 = vpop.f32.mrb[0].mxu0
        %360 = vdwg.mxu0
        %v365 = vunpack.c.l.b16 %v265
        %v366 = vunpack.c.l.b16 %v266
        %v367 = vunpack.c.l.b16 %v267
        %v368 = vunpack.c.l.b16 %v268
        %v369 = vpack.c.b16 %v366, %v365
        %v370 = vpack.c.b16 %v368, %v367
        %373 = vmatprep.subr.bf16.mxu0 0
        %374 = vmatpush1.bf16.msra.mxu0 %v369
        %375 = vmatprep.subr.bf16.mxu0 0
        %376 = vmatpush1.bf16.msra.mxu0 %v370
        %377 = vmatprep.subr.bf16.mxu0 0
        %378 = vmatpush1.bf16.msra.mxu0 0
        %379 = vmatprep.subr.bf16.mxu0 0
        %380 = vmatpush1.bf16.msra.mxu0 0
        %381 = vmatprep.subr.bf16.mxu0 0
        %382 = vmatpush1.bf16.msra.mxu0 0
        %383 = vmatprep.subr.bf16.mxu0 0
        %384 = vmatpush1.bf16.msra.mxu0 0
        %385 = vmatprep.subr.bf16.mxu0 0
        %386 = vmatpush1.bf16.msra.mxu0 0
        %387 = vmatprep.subr.bf16.mxu0 0
        %388 = vmatpush1.bf16.msra.mxu0 0
        %389 = vmatprep.subr.bf16.mxu0 0
        %390 = vmatpush1.bf16.msra.mxu0 0
        %391 = vmatprep.subr.bf16.mxu0 0
        %392 = vmatpush1.bf16.msra.mxu0 0
        %393 = vmatprep.subr.bf16.mxu0 0
        %394 = vmatpush1.bf16.msra.mxu0 0
        %395 = vmatprep.subr.bf16.mxu0 0
        %396 = vmatpush1.bf16.msra.mxu0 0
        %397 = vmatprep.subr.bf16.mxu0 0
        %398 = vmatpush1.bf16.msra.mxu0 0
        %399 = vmatprep.subr.bf16.mxu0 0
        %400 = vmatpush1.bf16.msra.mxu0 0
        %401 = vmatprep.subr.bf16.mxu0 0
        %402 = vmatpush1.bf16.msra.mxu0 0
        %403 = vmatprep.subr.bf16.mxu0 0
        %404 = vmatpush1.bf16.msra.mxu0 0
        %405 = vmatprep.mubr.bf16.mxu0 0
        %406 = vmatmul.mubr.bf16.gmra.mrb[0].mxu0 %v319
        %v407 = vpop.f32.mrb[0].mxu0
        %v408 = vadd.f32 %v292, %v407
        %v409 = vpop.f32.mrb[0].mxu0
        %v410 = vpop.f32.mrb[0].mxu0
        %v411 = vpop.f32.mrb[0].mxu0
        %412 = vdwg.mxu0
        %v417 = vunpack.c.l.b16 %v269
        %v418 = vunpack.c.l.b16 %v270
        %v419 = vunpack.c.l.b16 %v271
        %v420 = vunpack.c.l.b16 %v272
        %v421 = vpack.c.b16 %v418, %v417
        %v422 = vpack.c.b16 %v420, %v419
        %425 = vmatprep.subr.bf16.mxu0 0
        %426 = vmatpush1.bf16.msra.mxu0 %v421
        %427 = vmatprep.subr.bf16.mxu0 0
        %428 = vmatpush1.bf16.msra.mxu0 %v422
        %429 = vmatprep.subr.bf16.mxu0 0
        %430 = vmatpush1.bf16.msra.mxu0 0
        %431 = vmatprep.subr.bf16.mxu0 0
        %432 = vmatpush1.bf16.msra.mxu0 0
        %433 = vmatprep.subr.bf16.mxu0 0
        %434 = vmatpush1.bf16.msra.mxu0 0
        %435 = vmatprep.subr.bf16.mxu0 0
        %436 = vmatpush1.bf16.msra.mxu0 0
        %437 = vmatprep.subr.bf16.mxu0 0
        %438 = vmatpush1.bf16.msra.mxu0 0
        %439 = vmatprep.subr.bf16.mxu0 0
        %440 = vmatpush1.bf16.msra.mxu0 0
        %441 = vmatprep.subr.bf16.mxu0 0
        %442 = vmatpush1.bf16.msra.mxu0 0
        %443 = vmatprep.subr.bf16.mxu0 0
        %444 = vmatpush1.bf16.msra.mxu0 0
        %445 = vmatprep.subr.bf16.mxu0 0
        %446 = vmatpush1.bf16.msra.mxu0 0
        %447 = vmatprep.subr.bf16.mxu0 0
        %448 = vmatpush1.bf16.msra.mxu0 0
        %449 = vmatprep.subr.bf16.mxu0 0
        %450 = vmatpush1.bf16.msra.mxu0 0
        %451 = vmatprep.subr.bf16.mxu0 0
        %452 = vmatpush1.bf16.msra.mxu0 0
        %453 = vmatprep.subr.bf16.mxu0 0
        %454 = vmatpush1.bf16.msra.mxu0 0
        %455 = vmatprep.subr.bf16.mxu0 0
        %456 = vmatpush1.bf16.msra.mxu0 0
        %457 = vmatprep.mubr.bf16.mxu0 0
        %458 = vmatmul.mubr.bf16.gmra.mrb[0].mxu0 %v319
        %v459 = vpop.f32.mrb[0].mxu0
        %v460 = vadd.f32 %v296, %v459
        %v461 = vpop.f32.mrb[0].mxu0
        %v462 = vpop.f32.mrb[0].mxu0
        %v463 = vpop.f32.mrb[0].mxu0
        %464 = vdwg.mxu0
        %v469 = vunpack.c.l.b16 %v273
        %v470 = vunpack.c.l.b16 %v274
        %v471 = vunpack.c.l.b16 %v275
        %v472 = vunpack.c.l.b16 %v276
        %v473 = vpack.c.b16 %v470, %v469
        %v474 = vpack.c.b16 %v472, %v471
        %477 = vmatprep.subr.bf16.mxu0 0
        %478 = vmatpush1.bf16.msra.mxu0 %v473
        %479 = vmatprep.subr.bf16.mxu0 0
        %480 = vmatpush1.bf16.msra.mxu0 %v474
        %481 = vmatprep.subr.bf16.mxu0 0
        %482 = vmatpush1.bf16.msra.mxu0 0
        %483 = vmatprep.subr.bf16.mxu0 0
        %484 = vmatpush1.bf16.msra.mxu0 0
        %485 = vmatprep.subr.bf16.mxu0 0
        %486 = vmatpush1.bf16.msra.mxu0 0
        %487 = vmatprep.subr.bf16.mxu0 0
        %488 = vmatpush1.bf16.msra.mxu0 0
        %489 = vmatprep.subr.bf16.mxu0 0
        %490 = vmatpush1.bf16.msra.mxu0 0
        %491 = vmatprep.subr.bf16.mxu0 0
        %492 = vmatpush1.bf16.msra.mxu0 0
        %493 = vmatprep.subr.bf16.mxu0 0
        %494 = vmatpush1.bf16.msra.mxu0 0
        %495 = vmatprep.subr.bf16.mxu0 0
        %496 = vmatpush1.bf16.msra.mxu0 0
        %497 = vmatprep.subr.bf16.mxu0 0
        %498 = vmatpush1.bf16.msra.mxu0 0
        %499 = vmatprep.subr.bf16.mxu0 0
        %500 = vmatpush1.bf16.msra.mxu0 0
        %501 = vmatprep.subr.bf16.mxu0 0
        %502 = vmatpush1.bf16.msra.mxu0 0
        %503 = vmatprep.subr.bf16.mxu0 0
        %504 = vmatpush1.bf16.msra.mxu0 0
        %505 = vmatprep.subr.bf16.mxu0 0
        %506 = vmatpush1.bf16.msra.mxu0 0
        %507 = vmatprep.subr.bf16.mxu0 0
        %508 = vmatpush1.bf16.msra.mxu0 0
        %509 = vmatprep.mubr.bf16.mxu0 0
        %510 = vmatmul.mubr.bf16.gmra.mrb[0].mxu0 %v319
        %v511 = vpop.f32.mrb[0].mxu0
        %v512 = vadd.f32 %v300, %v511
        %v513 = vpop.f32.mrb[0].mxu0
        %v514 = vpop.f32.mrb[0].mxu0
        %v515 = vpop.f32.mrb[0].mxu0
        %516 = vdwg.mxu0
        %v517 = vmul.f32 %v356, 0.35355338
        %v518 = vmul.f32 %v408, 0.35355338
        %v519 = vmul.f32 %v460, 0.35355338
        %v520 = vmul.f32 %v512, 0.35355338
        %v521 = vpack.c.bf16 %v517, %v517
        %v522 = vpack.c.bf16 %v518, %v518
        %v523 = vpack.c.bf16 %v519, %v519
        %v524 = vpack.c.bf16 %v520, %v520
        %v525 = vpack.c.bf16 %v356, %v356
        %v526 = vpack.c.bf16 %v408, %v408
        %v527 = vpack.c.bf16 %v460, %v460
        %v528 = vpack.c.bf16 %v512, %v512
        %530 = vrot.lane.b32.xlu0 %v525, 120
        %v531 = vpop.permute.xlu0 %530
        %vm532 = vcmask 64512
        %v534 = vsel %vm532, %v521, 0
        %v537 = vsel %vm532, %v531, 0
        %539 = vmatprep.subr.bf16.mxu0 0
        %540 = vmatpush1.bf16.xpose.msra.mxu0 %v537
        %541 = vmatprep.subr.bf16.mxu0 0
        %542 = vmatpush1.bf16.xpose.msra.mxu0 0
        %543 = vmatprep.subr.bf16.mxu0 0
        %544 = vmatpush1.bf16.xpose.msra.mxu0 0
        %545 = vmatprep.subr.bf16.mxu0 0
        %546 = vmatpush1.bf16.xpose.msra.mxu0 0
        %547 = vmatprep.subr.bf16.mxu0 0
        %548 = vmatpush1.bf16.xpose.msra.mxu0 0
        %549 = vmatprep.subr.bf16.mxu0 0
        %550 = vmatpush1.bf16.xpose.msra.mxu0 0
        %551 = vmatprep.subr.bf16.mxu0 0
        %552 = vmatpush1.bf16.xpose.msra.mxu0 0
        %553 = vmatprep.subr.bf16.mxu0 0
        %554 = vmatpush1.bf16.xpose.msra.mxu0 0
        %555 = vmatprep.subr.bf16.mxu0 0
        %556 = vmatpush1.bf16.xpose.msra.mxu0 0
        %557 = vmatprep.subr.bf16.mxu0 0
        %558 = vmatpush1.bf16.xpose.msra.mxu0 0
        %559 = vmatprep.subr.bf16.mxu0 0
        %560 = vmatpush1.bf16.xpose.msra.mxu0 0
        %561 = vmatprep.subr.bf16.mxu0 0
        %562 = vmatpush1.bf16.xpose.msra.mxu0 0
        %563 = vmatprep.subr.bf16.mxu0 0
        %564 = vmatpush1.bf16.xpose.msra.mxu0 0
        %565 = vmatprep.subr.bf16.mxu0 0
        %566 = vmatpush1.bf16.xpose.msra.mxu0 0
        %567 = vmatprep.subr.bf16.mxu0 0
        %568 = vmatpush1.bf16.xpose.msra.mxu0 0
        %569 = vmatprep.subr.bf16.mxu0 0
        %570 = vmatpush1.bf16.xpose.msra.mxu0 0
        %571 = vmatprep.mubr.bf16.mxu0 0
        %572 = vmatmul.mubr.bf16.gmra.mrb[0].mxu0 %v534
        %v573 = vpop.f32.mrb[0].mxu0
        %v574 = vadd.f32 0.0, %v573
        %v575 = vpop.f32.mrb[0].mxu0
        %v576 = vpop.f32.mrb[0].mxu0
        %v577 = vpop.f32.mrb[0].mxu0
        %578 = vdwg.mxu0
        %580 = vrot.lane.b32.xlu0 %v526, 120
        %v581 = vpop.permute.xlu0 %580
        %v583 = vsel %vm532, %v522, 0
        %v586 = vsel %vm532, %v581, 0
        %588 = vmatprep.subr.bf16.mxu0 0
        %589 = vmatpush1.bf16.xpose.msra.mxu0 %v586
        %590 = vmatprep.subr.bf16.mxu0 0
        %591 = vmatpush1.bf16.xpose.msra.mxu0 0
        %592 = vmatprep.subr.bf16.mxu0 0
        %593 = vmatpush1.bf16.xpose.msra.mxu0 0
        %594 = vmatprep.subr.bf16.mxu0 0
        %595 = vmatpush1.bf16.xpose.msra.mxu0 0
        %596 = vmatprep.subr.bf16.mxu0 0
        %597 = vmatpush1.bf16.xpose.msra.mxu0 0
        %598 = vmatprep.subr.bf16.mxu0 0
        %599 = vmatpush1.bf16.xpose.msra.mxu0 0
        %600 = vmatprep.subr.bf16.mxu0 0
        %601 = vmatpush1.bf16.xpose.msra.mxu0 0
        %602 = vmatprep.subr.bf16.mxu0 0
        %603 = vmatpush1.bf16.xpose.msra.mxu0 0
        %604 = vmatprep.subr.bf16.mxu0 0
        %605 = vmatpush1.bf16.xpose.msra.mxu0 0
        %606 = vmatprep.subr.bf16.mxu0 0
        %607 = vmatpush1.bf16.xpose.msra.mxu0 0
        %608 = vmatprep.subr.bf16.mxu0 0
        %609 = vmatpush1.bf16.xpose.msra.mxu0 0
        %610 = vmatprep.subr.bf16.mxu0 0
        %611 = vmatpush1.bf16.xpose.msra.mxu0 0
        %612 = vmatprep.subr.bf16.mxu0 0
        %613 = vmatpush1.bf16.xpose.msra.mxu0 0
        %614 = vmatprep.subr.bf16.mxu0 0
        %615 = vmatpush1.bf16.xpose.msra.mxu0 0
        %616 = vmatprep.subr.bf16.mxu0 0
        %617 = vmatpush1.bf16.xpose.msra.mxu0 0
        %618 = vmatprep.subr.bf16.mxu0 0
        %619 = vmatpush1.bf16.xpose.msra.mxu0 0
        %620 = vmatprep.mubr.bf16.mxu0 0
        %621 = vmatmul.mubr.bf16.gmra.mrb[0].mxu0 %v583
        %v622 = vpop.f32.mrb[0].mxu0
        %v623 = vadd.f32 0.0, %v622
        %v624 = vpop.f32.mrb[0].mxu0
        %v625 = vpop.f32.mrb[0].mxu0
        %v626 = vpop.f32.mrb[0].mxu0
        %627 = vdwg.mxu0
        %629 = vrot.lane.b32.xlu0 %v527, 120
        %v630 = vpop.permute.xlu0 %629
        %v632 = vsel %vm532, %v523, 0
        %v635 = vsel %vm532, %v630, 0
        %637 = vmatprep.subr.bf16.mxu0 0
        %638 = vmatpush1.bf16.xpose.msra.mxu0 %v635
        %639 = vmatprep.subr.bf16.mxu0 0
        %640 = vmatpush1.bf16.xpose.msra.mxu0 0
        %641 = vmatprep.subr.bf16.mxu0 0
        %642 = vmatpush1.bf16.xpose.msra.mxu0 0
        %643 = vmatprep.subr.bf16.mxu0 0
        %644 = vmatpush1.bf16.xpose.msra.mxu0 0
        %645 = vmatprep.subr.bf16.mxu0 0
        %646 = vmatpush1.bf16.xpose.msra.mxu0 0
        %647 = vmatprep.subr.bf16.mxu0 0
        %648 = vmatpush1.bf16.xpose.msra.mxu0 0
        %649 = vmatprep.subr.bf16.mxu0 0
        %650 = vmatpush1.bf16.xpose.msra.mxu0 0
        %651 = vmatprep.subr.bf16.mxu0 0
        %652 = vmatpush1.bf16.xpose.msra.mxu0 0
        %653 = vmatprep.subr.bf16.mxu0 0
        %654 = vmatpush1.bf16.xpose.msra.mxu0 0
        %655 = vmatprep.subr.bf16.mxu0 0
        %656 = vmatpush1.bf16.xpose.msra.mxu0 0
        %657 = vmatprep.subr.bf16.mxu0 0
        %658 = vmatpush1.bf16.xpose.msra.mxu0 0
        %659 = vmatprep.subr.bf16.mxu0 0
        %660 = vmatpush1.bf16.xpose.msra.mxu0 0
        %661 = vmatprep.subr.bf16.mxu0 0
        %662 = vmatpush1.bf16.xpose.msra.mxu0 0
        %663 = vmatprep.subr.bf16.mxu0 0
        %664 = vmatpush1.bf16.xpose.msra.mxu0 0
        %665 = vmatprep.subr.bf16.mxu0 0
        %666 = vmatpush1.bf16.xpose.msra.mxu0 0
        %667 = vmatprep.subr.bf16.mxu0 0
        %668 = vmatpush1.bf16.xpose.msra.mxu0 0
        %669 = vmatprep.mubr.bf16.mxu0 0
        %670 = vmatmul.mubr.bf16.gmra.mrb[0].mxu0 %v632
        %v671 = vpop.f32.mrb[0].mxu0
        %v672 = vadd.f32 0.0, %v671
        %v673 = vpop.f32.mrb[0].mxu0
        %v674 = vpop.f32.mrb[0].mxu0
        %v675 = vpop.f32.mrb[0].mxu0
        %676 = vdwg.mxu0
        %678 = vrot.lane.b32.xlu0 %v528, 120
        %v679 = vpop.permute.xlu0 %678
        %v681 = vsel %vm532, %v524, 0
        %v684 = vsel %vm532, %v679, 0
        %686 = vmatprep.subr.bf16.mxu0 0
        %687 = vmatpush1.bf16.xpose.msra.mxu0 %v684
        %688 = vmatprep.subr.bf16.mxu0 0
        %689 = vmatpush1.bf16.xpose.msra.mxu0 0
        %690 = vmatprep.subr.bf16.mxu0 0
        %691 = vmatpush1.bf16.xpose.msra.mxu0 0
        %692 = vmatprep.subr.bf16.mxu0 0
        %693 = vmatpush1.bf16.xpose.msra.mxu0 0
        %694 = vmatprep.subr.bf16.mxu0 0
        %695 = vmatpush1.bf16.xpose.msra.mxu0 0
        %696 = vmatprep.subr.bf16.mxu0 0
        %697 = vmatpush1.bf16.xpose.msra.mxu0 0
        %698 = vmatprep.subr.bf16.mxu0 0
        %699 = vmatpush1.bf16.xpose.msra.mxu0 0
        %700 = vmatprep.subr.bf16.mxu0 0
        %701 = vmatpush1.bf16.xpose.msra.mxu0 0
        %702 = vmatprep.subr.bf16.mxu0 0
        %703 = vmatpush1.bf16.xpose.msra.mxu0 0
        %704 = vmatprep.subr.bf16.mxu0 0
        %705 = vmatpush1.bf16.xpose.msra.mxu0 0
        %706 = vmatprep.subr.bf16.mxu0 0
        %707 = vmatpush1.bf16.xpose.msra.mxu0 0
        %708 = vmatprep.subr.bf16.mxu0 0
        %709 = vmatpush1.bf16.xpose.msra.mxu0 0
        %710 = vmatprep.subr.bf16.mxu0 0
        %711 = vmatpush1.bf16.xpose.msra.mxu0 0
        %712 = vmatprep.subr.bf16.mxu0 0
        %713 = vmatpush1.bf16.xpose.msra.mxu0 0
        %714 = vmatprep.subr.bf16.mxu0 0
        %715 = vmatpush1.bf16.xpose.msra.mxu0 0
        %716 = vmatprep.subr.bf16.mxu0 0
        %717 = vmatpush1.bf16.xpose.msra.mxu0 0
        %718 = vmatprep.mubr.bf16.mxu0 0
        %719 = vmatmul.mubr.bf16.gmra.mrb[0].mxu0 %v681
        %v720 = vpop.f32.mrb[0].mxu0
        %v721 = vadd.f32 0.0, %v720
        %v722 = vpop.f32.mrb[0].mxu0
        %v723 = vpop.f32.mrb[0].mxu0
        %v724 = vpop.f32.mrb[0].mxu0
        %725 = vdwg.mxu0
        %v726 = vsel %vm532, %v574, -inf
        %727 = vmax.xlane.f32.xlu0 %v726
        %v728 = vpop.xlane.xlu0 %727
        %v729 = vsel %vm532, %v623, -inf
        %730 = vmax.xlane.f32.xlu0 %v729
        %v731 = vpop.xlane.xlu0 %730
        %v732 = vsel %vm532, %v672, -inf
        %733 = vmax.xlane.f32.xlu0 %v732
        %v734 = vpop.xlane.xlu0 %733
        %v735 = vsel %vm532, %v721, -inf
        %736 = vmax.xlane.f32.xlu0 %v735
        %v737 = vpop.xlane.xlu0 %736
        %v738 = vsub.f32 %v574, %v728
        %v739 = vsub.f32 %v623, %v731
        %v740 = vsub.f32 %v672, %v734
        %v741 = vsub.f32 %v721, %v737
        %v742 = vmul.f32 %v738, 1.442695
        %v743 = vpow.pop %v742
        %v744 = vmul.f32 %v739, 1.442695
        %v745 = vpow.pop %v744
        %v746 = vmul.f32 %v740, 1.442695
        %v747 = vpow.pop %v746
        %v748 = vmul.f32 %v741, 1.442695
        %v749 = vpow.pop %v748
        %v750 = vsel %vm532, %v743, 0.0
        %751 = vadd.xlane.f32.xlu0 %v750
        %v752 = vpop.xlane.xlu0 %751
        %v753 = vsel %vm532, %v745, 0.0
        %754 = vadd.xlane.f32.xlu0 %v753
        %v755 = vpop.xlane.xlu0 %754
        %v756 = vsel %vm532, %v747, 0.0
        %757 = vadd.xlane.f32.xlu0 %v756
        %v758 = vpop.xlane.xlu0 %757
        %v759 = vsel %vm532, %v749, 0.0
        %760 = vadd.xlane.f32.xlu0 %v759
        %v761 = vpop.xlane.xlu0 %760
        %v762 = vrcp.pop %v752
        %v763 = vrcp.pop %v755
        %v764 = vrcp.pop %v758
        %v765 = vrcp.pop %v761
        %v766 = vmul.f32 %v743, %v762
        %v767 = vmul.f32 %v745, %v763
        %v768 = vmul.f32 %v747, %v764
        %v769 = vmul.f32 %v749, %v765
        %770 = vst.msk [vmem:[%s253] sm:$0xff] %vm532, %v766
        %771 = vst.msk [vmem:[%s253 + $0x8] sm:$0xff] %vm532, %v767
        %772 = vst.msk [vmem:[%s253 + $0x10] sm:$0xff] %vm532, %v768
        %773 = vst.msk [vmem:[%s253 + $0x18] sm:$0xff] %vm532, %v769
        %v774 = vpack.c.bf16 %v766, %v766
        %v775 = vpack.c.bf16 %v767, %v767
        %v776 = vpack.c.bf16 %v768, %v768
        %v777 = vpack.c.bf16 %v769, %v769
        %778 = vrot.lane.b32.xlu0 %v525, 112
        %v779 = vpop.permute.xlu0 %778
        %v781 = vsel %vm532, %v774, 0
        %vm783 = vcmask 1043456
        %v785 = vsel %vm783, %v779, 0
        %787 = vmatprep.subr.bf16.mxu0 0
        %788 = vmatpush1.bf16.msra.mxu0 %v785
        %789 = vmatprep.subr.bf16.mxu0 0
        %790 = vmatpush1.bf16.msra.mxu0 0
        %791 = vmatprep.subr.bf16.mxu0 0
        %792 = vmatpush1.bf16.msra.mxu0 0
        %793 = vmatprep.subr.bf16.mxu0 0
        %794 = vmatpush1.bf16.msra.mxu0 0
        %795 = vmatprep.subr.bf16.mxu0 0
        %796 = vmatpush1.bf16.msra.mxu0 0
        %797 = vmatprep.subr.bf16.mxu0 0
        %798 = vmatpush1.bf16.msra.mxu0 0
        %799 = vmatprep.subr.bf16.mxu0 0
        %800 = vmatpush1.bf16.msra.mxu0 0
        %801 = vmatprep.subr.bf16.mxu0 0
        %802 = vmatpush1.bf16.msra.mxu0 0
        %803 = vmatprep.subr.bf16.mxu0 0
        %804 = vmatpush1.bf16.msra.mxu0 0
        %805 = vmatprep.subr.bf16.mxu0 0
        %806 = vmatpush1.bf16.msra.mxu0 0
        %807 = vmatprep.subr.bf16.mxu0 0
        %808 = vmatpush1.bf16.msra.mxu0 0
        %809 = vmatprep.subr.bf16.mxu0 0
        %810 = vmatpush1.bf16.msra.mxu0 0
        %811 = vmatprep.subr.bf16.mxu0 0
        %812 = vmatpush1.bf16.msra.mxu0 0
        %813 = vmatprep.subr.bf16.mxu0 0
        %814 = vmatpush1.bf16.msra.mxu0 0
        %815 = vmatprep.subr.bf16.mxu0 0
        %816 = vmatpush1.bf16.msra.mxu0 0
        %817 = vmatprep.subr.bf16.mxu0 0
        %818 = vmatpush1.bf16.msra.mxu0 0
        %819 = vmatprep.mubr.bf16.mxu0 0
        %820 = vmatmul.mubr.bf16.gmra.mrb[0].mxu0 %v781
        %v821 = vpop.f32.mrb[0].mxu0
        %v822 = vadd.f32 0.0, %v821
        %v823 = vpop.f32.mrb[0].mxu0
        %v824 = vpop.f32.mrb[0].mxu0
        %v825 = vpop.f32.mrb[0].mxu0
        %826 = vdwg.mxu0
        %827 = vrot.lane.b32.xlu0 %v526, 112
        %v828 = vpop.permute.xlu0 %827
        %v830 = vsel %vm532, %v775, 0
        %v833 = vsel %vm783, %v828, 0
        %835 = vmatprep.subr.bf16.mxu0 0
        %836 = vmatpush1.bf16.msra.mxu0 %v833
        %837 = vmatprep.subr.bf16.mxu0 0
        %838 = vmatpush1.bf16.msra.mxu0 0
        %839 = vmatprep.subr.bf16.mxu0 0
        %840 = vmatpush1.bf16.msra.mxu0 0
        %841 = vmatprep.subr.bf16.mxu0 0
        %842 = vmatpush1.bf16.msra.mxu0 0
        %843 = vmatprep.subr.bf16.mxu0 0
        %844 = vmatpush1.bf16.msra.mxu0 0
        %845 = vmatprep.subr.bf16.mxu0 0
        %846 = vmatpush1.bf16.msra.mxu0 0
        %847 = vmatprep.subr.bf16.mxu0 0
        %848 = vmatpush1.bf16.msra.mxu0 0
        %849 = vmatprep.subr.bf16.mxu0 0
        %850 = vmatpush1.bf16.msra.mxu0 0
        %851 = vmatprep.subr.bf16.mxu0 0
        %852 = vmatpush1.bf16.msra.mxu0 0
        %853 = vmatprep.subr.bf16.mxu0 0
        %854 = vmatpush1.bf16.msra.mxu0 0
        %855 = vmatprep.subr.bf16.mxu0 0
        %856 = vmatpush1.bf16.msra.mxu0 0
        %857 = vmatprep.subr.bf16.mxu0 0
        %858 = vmatpush1.bf16.msra.mxu0 0
        %859 = vmatprep.subr.bf16.mxu0 0
        %860 = vmatpush1.bf16.msra.mxu0 0
        %861 = vmatprep.subr.bf16.mxu0 0
        %862 = vmatpush1.bf16.msra.mxu0 0
        %863 = vmatprep.subr.bf16.mxu0 0
        %864 = vmatpush1.bf16.msra.mxu0 0
        %865 = vmatprep.subr.bf16.mxu0 0
        %866 = vmatpush1.bf16.msra.mxu0 0
        %867 = vmatprep.mubr.bf16.mxu0 0
        %868 = vmatmul.mubr.bf16.gmra.mrb[0].mxu0 %v830
        %v869 = vpop.f32.mrb[0].mxu0
        %v870 = vadd.f32 0.0, %v869
        %v871 = vpop.f32.mrb[0].mxu0
        %v872 = vpop.f32.mrb[0].mxu0
        %v873 = vpop.f32.mrb[0].mxu0
        %874 = vdwg.mxu0
        %875 = vrot.lane.b32.xlu0 %v527, 112
        %v876 = vpop.permute.xlu0 %875
        %v878 = vsel %vm532, %v776, 0
        %v881 = vsel %vm783, %v876, 0
        %883 = vmatprep.subr.bf16.mxu0 0
        %884 = vmatpush1.bf16.msra.mxu0 %v881
        %885 = vmatprep.subr.bf16.mxu0 0
        %886 = vmatpush1.bf16.msra.mxu0 0
        %887 = vmatprep.subr.bf16.mxu0 0
        %888 = vmatpush1.bf16.msra.mxu0 0
        %889 = vmatprep.subr.bf16.mxu0 0
        %890 = vmatpush1.bf16.msra.mxu0 0
        %891 = vmatprep.subr.bf16.mxu0 0
        %892 = vmatpush1.bf16.msra.mxu0 0
        %893 = vmatprep.subr.bf16.mxu0 0
        %894 = vmatpush1.bf16.msra.mxu0 0
        %895 = vmatprep.subr.bf16.mxu0 0
        %896 = vmatpush1.bf16.msra.mxu0 0
        %897 = vmatprep.subr.bf16.mxu0 0
        %898 = vmatpush1.bf16.msra.mxu0 0
        %899 = vmatprep.subr.bf16.mxu0 0
        %900 = vmatpush1.bf16.msra.mxu0 0
        %901 = vmatprep.subr.bf16.mxu0 0
        %902 = vmatpush1.bf16.msra.mxu0 0
        %903 = vmatprep.subr.bf16.mxu0 0
        %904 = vmatpush1.bf16.msra.mxu0 0
        %905 = vmatprep.subr.bf16.mxu0 0
        %906 = vmatpush1.bf16.msra.mxu0 0
        %907 = vmatprep.subr.bf16.mxu0 0
        %908 = vmatpush1.bf16.msra.mxu0 0
        %909 = vmatprep.subr.bf16.mxu0 0
        %910 = vmatpush1.bf16.msra.mxu0 0
        %911 = vmatprep.subr.bf16.mxu0 0
        %912 = vmatpush1.bf16.msra.mxu0 0
        %913 = vmatprep.subr.bf16.mxu0 0
        %914 = vmatpush1.bf16.msra.mxu0 0
        %915 = vmatprep.mubr.bf16.mxu0 0
        %916 = vmatmul.mubr.bf16.gmra.mrb[0].mxu0 %v878
        %v917 = vpop.f32.mrb[0].mxu0
        %v918 = vadd.f32 0.0, %v917
        %v919 = vpop.f32.mrb[0].mxu0
        %v920 = vpop.f32.mrb[0].mxu0
        %v921 = vpop.f32.mrb[0].mxu0
        %922 = vdwg.mxu0
        %923 = vrot.lane.b32.xlu0 %v528, 112
        %v924 = vpop.permute.xlu0 %923
        %v926 = vsel %vm532, %v777, 0
        %v929 = vsel %vm783, %v924, 0
        %931 = vmatprep.subr.bf16.mxu0 0
        %932 = vmatpush1.bf16.msra.mxu0 %v929
        %933 = vmatprep.subr.bf16.mxu0 0
        %934 = vmatpush1.bf16.msra.mxu0 0
        %935 = vmatprep.subr.bf16.mxu0 0
        %936 = vmatpush1.bf16.msra.mxu0 0
        %937 = vmatprep.subr.bf16.mxu0 0
        %938 = vmatpush1.bf16.msra.mxu0 0
        %939 = vmatprep.subr.bf16.mxu0 0
        %940 = vmatpush1.bf16.msra.mxu0 0
        %941 = vmatprep.subr.bf16.mxu0 0
        %942 = vmatpush1.bf16.msra.mxu0 0
        %943 = vmatprep.subr.bf16.mxu0 0
        %944 = vmatpush1.bf16.msra.mxu0 0
        %945 = vmatprep.subr.bf16.mxu0 0
        %946 = vmatpush1.bf16.msra.mxu0 0
        %947 = vmatprep.subr.bf16.mxu0 0
        %948 = vmatpush1.bf16.msra.mxu0 0
        %949 = vmatprep.subr.bf16.mxu0 0
        %950 = vmatpush1.bf16.msra.mxu0 0
        %951 = vmatprep.subr.bf16.mxu0 0
        %952 = vmatpush1.bf16.msra.mxu0 0
        %953 = vmatprep.subr.bf16.mxu0 0
        %954 = vmatpush1.bf16.msra.mxu0 0
        %955 = vmatprep.subr.bf16.mxu0 0
        %956 = vmatpush1.bf16.msra.mxu0 0
        %957 = vmatprep.subr.bf16.mxu0 0
        %958 = vmatpush1.bf16.msra.mxu0 0
        %959 = vmatprep.subr.bf16.mxu0 0
        %960 = vmatpush1.bf16.msra.mxu0 0
        %961 = vmatprep.subr.bf16.mxu0 0
        %962 = vmatpush1.bf16.msra.mxu0 0
        %963 = vmatprep.mubr.bf16.mxu0 0
        %964 = vmatmul.mubr.bf16.gmra.mrb[0].mxu0 %v926
        %v965 = vpop.f32.mrb[0].mxu0
        %v966 = vadd.f32 0.0, %v965
        %v967 = vpop.f32.mrb[0].mxu0
        %v968 = vpop.f32.mrb[0].mxu0
        %v969 = vpop.f32.mrb[0].mxu0
        %970 = vdwg.mxu0
        %v971 = vpack.c.bf16 %v822, %v822
        %v972 = vpack.c.bf16 %v870, %v870
        %v973 = vpack.c.bf16 %v918, %v918
        %v974 = vpack.c.bf16 %v966, %v966
        %v975 = vld [vmem:[%s3] sm:$0xf]
        %v976 = vld [vmem:[%s3 + $0x4] sm:$0xf]
        %v977 = vld [vmem:[%s3 + $0x8] sm:$0xf]
        %v978 = vld [vmem:[%s3 + $0xc] sm:$0xf]
        %v980 = vsel %vm532, %v971, 0
        %v983 = vsel %vm783, %v975, 0
        %985 = vmatprep.subr.bf16.mxu0 0
        %986 = vmatpush1.bf16.msra.mxu0 %v983
        %987 = vmatprep.subr.bf16.mxu0 0
        %988 = vmatpush1.bf16.msra.mxu0 0
        %989 = vmatprep.subr.bf16.mxu0 0
        %990 = vmatpush1.bf16.msra.mxu0 0
        %991 = vmatprep.subr.bf16.mxu0 0
        %992 = vmatpush1.bf16.msra.mxu0 0
        %993 = vmatprep.subr.bf16.mxu0 0
        %994 = vmatpush1.bf16.msra.mxu0 0
        %995 = vmatprep.subr.bf16.mxu0 0
        %996 = vmatpush1.bf16.msra.mxu0 0
        %997 = vmatprep.subr.bf16.mxu0 0
        %998 = vmatpush1.bf16.msra.mxu0 0
        %999 = vmatprep.subr.bf16.mxu0 0
        %1000 = vmatpush1.bf16.msra.mxu0 0
        %1001 = vmatprep.subr.bf16.mxu0 0
        %1002 = vmatpush1.bf16.msra.mxu0 0
        %1003 = vmatprep.subr.bf16.mxu0 0
        %1004 = vmatpush1.bf16.msra.mxu0 0
        %1005 = vmatprep.subr.bf16.mxu0 0
        %1006 = vmatpush1.bf16.msra.mxu0 0
        %1007 = vmatprep.subr.bf16.mxu0 0
        %1008 = vmatpush1.bf16.msra.mxu0 0
        %1009 = vmatprep.subr.bf16.mxu0 0
        %1010 = vmatpush1.bf16.msra.mxu0 0
        %1011 = vmatprep.subr.bf16.mxu0 0
        %1012 = vmatpush1.bf16.msra.mxu0 0
        %1013 = vmatprep.subr.bf16.mxu0 0
        %1014 = vmatpush1.bf16.msra.mxu0 0
        %1015 = vmatprep.subr.bf16.mxu0 0
        %1016 = vmatpush1.bf16.msra.mxu0 0
        %1017 = vmatprep.mubr.bf16.mxu0 0
        %1018 = vmatmul.mubr.bf16.gmra.mrb[0].mxu0 %v980
        %v1019 = vpop.f32.mrb[0].mxu0
        %v1020 = vadd.f32 0.0, %v1019
        %v1021 = vpop.f32.mrb[0].mxu0
        %v1022 = vpop.f32.mrb[0].mxu0
        %v1023 = vpop.f32.mrb[0].mxu0
        %1024 = vdwg.mxu0
        %v1026 = vsel %vm532, %v972, 0
        %v1029 = vsel %vm783, %v976, 0
        %1031 = vmatprep.subr.bf16.mxu0 0
        %1032 = vmatpush1.bf16.msra.mxu0 %v1029
        %1033 = vmatprep.subr.bf16.mxu0 0
        %1034 = vmatpush1.bf16.msra.mxu0 0
        %1035 = vmatprep.subr.bf16.mxu0 0
        %1036 = vmatpush1.bf16.msra.mxu0 0
        %1037 = vmatprep.subr.bf16.mxu0 0
        %1038 = vmatpush1.bf16.msra.mxu0 0
        %1039 = vmatprep.subr.bf16.mxu0 0
        %1040 = vmatpush1.bf16.msra.mxu0 0
        %1041 = vmatprep.subr.bf16.mxu0 0
        %1042 = vmatpush1.bf16.msra.mxu0 0
        %1043 = vmatprep.subr.bf16.mxu0 0
        %1044 = vmatpush1.bf16.msra.mxu0 0
        %1045 = vmatprep.subr.bf16.mxu0 0
        %1046 = vmatpush1.bf16.msra.mxu0 0
        %1047 = vmatprep.subr.bf16.mxu0 0
        %1048 = vmatpush1.bf16.msra.mxu0 0
        %1049 = vmatprep.subr.bf16.mxu0 0
        %1050 = vmatpush1.bf16.msra.mxu0 0
        %1051 = vmatprep.subr.bf16.mxu0 0
        %1052 = vmatpush1.bf16.msra.mxu0 0
        %1053 = vmatprep.subr.bf16.mxu0 0
        %1054 = vmatpush1.bf16.msra.mxu0 0
        %1055 = vmatprep.subr.bf16.mxu0 0
        %1056 = vmatpush1.bf16.msra.mxu0 0
        %1057 = vmatprep.subr.bf16.mxu0 0
        %1058 = vmatpush1.bf16.msra.mxu0 0
        %1059 = vmatprep.subr.bf16.mxu0 0
        %1060 = vmatpush1.bf16.msra.mxu0 0
        %1061 = vmatprep.subr.bf16.mxu0 0
        %1062 = vmatpush1.bf16.msra.mxu0 0
        %1063 = vmatprep.mubr.bf16.mxu0 0
        %1064 = vmatmul.mubr.bf16.gmra.mrb[0].mxu0 %v1026
        %v1065 = vpop.f32.mrb[0].mxu0
        %v1066 = vadd.f32 0.0, %v1065
        %v1067 = vpop.f32.mrb[0].mxu0
        %v1068 = vpop.f32.mrb[0].mxu0
        %v1069 = vpop.f32.mrb[0].mxu0
        %1070 = vdwg.mxu0
        %v1072 = vsel %vm532, %v973, 0
        %v1075 = vsel %vm783, %v977, 0
        %1077 = vmatprep.subr.bf16.mxu0 0
        %1078 = vmatpush1.bf16.msra.mxu0 %v1075
        %1079 = vmatprep.subr.bf16.mxu0 0
        %1080 = vmatpush1.bf16.msra.mxu0 0
        %1081 = vmatprep.subr.bf16.mxu0 0
        %1082 = vmatpush1.bf16.msra.mxu0 0
        %1083 = vmatprep.subr.bf16.mxu0 0
        %1084 = vmatpush1.bf16.msra.mxu0 0
        %1085 = vmatprep.subr.bf16.mxu0 0
        %1086 = vmatpush1.bf16.msra.mxu0 0
        %1087 = vmatprep.subr.bf16.mxu0 0
        %1088 = vmatpush1.bf16.msra.mxu0 0
        %1089 = vmatprep.subr.bf16.mxu0 0
        %1090 = vmatpush1.bf16.msra.mxu0 0
        %1091 = vmatprep.subr.bf16.mxu0 0
        %1092 = vmatpush1.bf16.msra.mxu0 0
        %1093 = vmatprep.subr.bf16.mxu0 0
        %1094 = vmatpush1.bf16.msra.mxu0 0
        %1095 = vmatprep.subr.bf16.mxu0 0
        %1096 = vmatpush1.bf16.msra.mxu0 0
        %1097 = vmatprep.subr.bf16.mxu0 0
        %1098 = vmatpush1.bf16.msra.mxu0 0
        %1099 = vmatprep.subr.bf16.mxu0 0
        %1100 = vmatpush1.bf16.msra.mxu0 0
        %1101 = vmatprep.subr.bf16.mxu0 0
        %1102 = vmatpush1.bf16.msra.mxu0 0
        %1103 = vmatprep.subr.bf16.mxu0 0
        %1104 = vmatpush1.bf16.msra.mxu0 0
        %1105 = vmatprep.subr.bf16.mxu0 0
        %1106 = vmatpush1.bf16.msra.mxu0 0
        %1107 = vmatprep.subr.bf16.mxu0 0
        %1108 = vmatpush1.bf16.msra.mxu0 0
        %1109 = vmatprep.mubr.bf16.mxu0 0
        %1110 = vmatmul.mubr.bf16.gmra.mrb[0].mxu0 %v1072
        %v1111 = vpop.f32.mrb[0].mxu0
        %v1112 = vadd.f32 0.0, %v1111
        %v1113 = vpop.f32.mrb[0].mxu0
        %v1114 = vpop.f32.mrb[0].mxu0
        %v1115 = vpop.f32.mrb[0].mxu0
        %1116 = vdwg.mxu0
        %v1118 = vsel %vm532, %v974, 0
        %v1121 = vsel %vm783, %v978, 0
        %1123 = vmatprep.subr.bf16.mxu0 0
        %1124 = vmatpush1.bf16.msra.mxu0 %v1121
        %1125 = vmatprep.subr.bf16.mxu0 0
        %1126 = vmatpush1.bf16.msra.mxu0 0
        %1127 = vmatprep.subr.bf16.mxu0 0
        %1128 = vmatpush1.bf16.msra.mxu0 0
        %1129 = vmatprep.subr.bf16.mxu0 0
        %1130 = vmatpush1.bf16.msra.mxu0 0
        %1131 = vmatprep.subr.bf16.mxu0 0
        %1132 = vmatpush1.bf16.msra.mxu0 0
        %1133 = vmatprep.subr.bf16.mxu0 0
        %1134 = vmatpush1.bf16.msra.mxu0 0
        %1135 = vmatprep.subr.bf16.mxu0 0
        %1136 = vmatpush1.bf16.msra.mxu0 0
        %1137 = vmatprep.subr.bf16.mxu0 0
        %1138 = vmatpush1.bf16.msra.mxu0 0
        %1139 = vmatprep.subr.bf16.mxu0 0
        %1140 = vmatpush1.bf16.msra.mxu0 0
        %1141 = vmatprep.subr.bf16.mxu0 0
        %1142 = vmatpush1.bf16.msra.mxu0 0
        %1143 = vmatprep.subr.bf16.mxu0 0
        %1144 = vmatpush1.bf16.msra.mxu0 0
        %1145 = vmatprep.subr.bf16.mxu0 0
        %1146 = vmatpush1.bf16.msra.mxu0 0
        %1147 = vmatprep.subr.bf16.mxu0 0
        %1148 = vmatpush1.bf16.msra.mxu0 0
        %1149 = vmatprep.subr.bf16.mxu0 0
        %1150 = vmatpush1.bf16.msra.mxu0 0
        %1151 = vmatprep.subr.bf16.mxu0 0
        %1152 = vmatpush1.bf16.msra.mxu0 0
        %1153 = vmatprep.subr.bf16.mxu0 0
        %1154 = vmatpush1.bf16.msra.mxu0 0
        %1155 = vmatprep.mubr.bf16.mxu0 0
        %1156 = vmatmul.mubr.bf16.gmra.mrb[0].mxu0 %v1118
        %v1157 = vpop.f32.mrb[0].mxu0
        %v1158 = vadd.f32 0.0, %v1157
        %v1159 = vpop.f32.mrb[0].mxu0
        %v1160 = vpop.f32.mrb[0].mxu0
        %v1161 = vpop.f32.mrb[0].mxu0
        %1162 = vdwg.mxu0
        %v1163 = vsel %vm317, %v1020, 0.0
        %v1164 = vsel %vm317, %v1066, 0.0
        %v1165 = vadd.f32 %v1163, %v1164
        %v1166 = vsel %vm317, %v1112, 0.0
        %v1167 = vadd.f32 %v1165, %v1166
        %v1168 = vsel %vm317, %v1158, 0.0
        %v1169 = vadd.f32 %v1167, %v1168
        %v1170 = vld [vmem:[%s4] sm:$0x1]
        %v1172 = vlaneseq
        %v1173 = vshrl.u32 %v1172, 7
        %v1174 = vsub.s32 0, %v1173
        %v1175 = vrot.slane %v1170, %v1174
        %v1177 = vadd.f32 %v1169, %v1175
        %1178 = vst.msk [vmem:[%s246] sm:$0xff] %vm317, %v1177
        %s1179 = sand.u32 %s142, 1
        %s1180 = scalar_lea.sflag [#allocation3], %s1179
        %s1181 = sand.u32 %s142, 1
        %s1182 = smul.addr %s1181, 8
        %s1183 = scalar_lea.vmem [#allocation2], %s1182
        %s1184 = sand.u32 %s168, 1
        %s1185 = scalar_lea.sflag [#allocation5], %s1184
        %s1186 = sand.u32 %s168, 1
        %s1187 = smul.addr %s1186, 32
        %s1188 = scalar_lea.vmem [#allocation4], %s1187
        // Predicated region
        $region41: #{attention_forward.1} parent=39 // pred_check
          %p1189 = pneg %p152
        $region42: #{attention_forward.1} parent=39 // pred_check_branch
          %1191 = sbr.rel (%p1189) target = $region44
        $region43: #{attention_forward.1} parent=39 // pred_region
          %s1193 = ssub.s32 128, 128
          %1194 = vsyncadd %s1180, %s1193
          %s1195 = smul.addr %s24, 128
          %s1196 = scalar_lea.hbm %s5, %s1195
          %s1198 = sshll.u32 %s1183, 4
          %s1199 = int_to_ptr.vmem [resolvable:$true] %s1198
          %1201 = dma.vmem_to_hbm [thread:$0]  %s1199, 128, %s1196, %s1180
        $region44: #{attention_forward.1} parent=39 // pred_fallthru
          _
        // Predicated region
        $region45: #{attention_forward.1} parent=39 // pred_check
          %p1202 = pneg %p178
        $region46: #{attention_forward.1} parent=39 // pred_check_branch
          %1204 = sbr.rel (%p1202) target = $region48
        $region47: #{attention_forward.1} parent=39 // pred_region
          %s1206 = ssub.s32 512, 512
          %1207 = vsyncadd %s1185, %s1206
          %s1208 = smul.addr %s24, 4
          %s1209 = smul.addr %s1208, 128
          %s1210 = scalar_lea.hbm %s6, %s1209
          %s1211 = sshll.u32 %s1188, 4
          %s1212 = int_to_ptr.vmem [resolvable:$true] %s1211
          %1217 = dma.vmem_to_hbm [thread:$0]  %s1212, 512, %s1210, %s1185, 128, 128, 8
        $region48: #{attention_forward.1} parent=39 // pred_fallthru
          _
      $region40: #{attention_forward.1} parent=5 // pred_fallthru
        _
      %p1218 = scmp.le.s32.totalorder 2, %s19
      // Predicated region
      $region49: #{attention_forward.1} parent=5 // pred_check
        %p1219 = pneg %p1218
      $region50: #{attention_forward.1} parent=5 // pred_check_branch
        %1221 = sbr.rel (%p1219) target = $region52
      $region51: #{attention_forward.1} parent=5 // pred_region
        %s1222 = ssub.s32 %s19, 2
        // Predicated region
        $region53: #{attention_forward.1} parent=51 // pred_check
          %p1223 = pneg %p158
        $region54: #{attention_forward.1} parent=51 // pred_check_branch
          %1225 = sbr.rel (%p1223) target = $region56
        $region55: #{attention_forward.1} parent=51 // pred_region
          %s1226 = sand.u32 %s143, 1
          %s1227 = scalar_lea.sflag [#allocation3], %s1226
          %s1228 = sand.u32 %s143, 1
          %s1229 = smul.addr %s1228, 8
          %s1230 = scalar_lea.vmem [#allocation2], %s1229
          %1231 = dma.done %s1227, 128
        $region56: #{attention_forward.1} parent=51 // pred_fallthru
          _
        // Predicated region
        $region57: #{attention_forward.1} parent=51 // pred_check
          %p1232 = pneg %p184
        $region58: #{attention_forward.1} parent=51 // pred_check_branch
          %1234 = sbr.rel (%p1232) target = $region60
        $region59: #{attention_forward.1} parent=51 // pred_region
          %s1235 = sand.u32 %s169, 1
          %s1236 = scalar_lea.sflag [#allocation5], %s1235
          %s1237 = sand.u32 %s169, 1
          %s1238 = smul.addr %s1237, 32
          %s1239 = scalar_lea.vmem [#allocation4], %s1238
          %1240 = dma.done %s1236, 512
        $region60: #{attention_forward.1} parent=51 // pred_fallthru
          _
      $region52: #{attention_forward.1} parent=5 // pred_fallthru
        _
    $region6: #{attention_forward.1} parent=1 // loop_footer
      %s23 = sadd.s32 1, %s19
    $region7: #{attention_forward.1} parent=1 // loop_footer_branch
      %18 = sbr.rel target = $region3
    $region8: #{attention_forward.1} parent=1 // loop_exit
      _
    %1241 = vsyncpa [#allocation3], 1
    %s1242 = scalar_lea.sflag [#allocation3], 1
    %1243 = vsyncpa %s1242, 1
    %1244 = vsyncpa [#allocation5], 1
    %s1245 = scalar_lea.sflag [#allocation5], 1
    %1246 = vsyncpa %s1245, 1

</llo_original>
